<compile_context>
chip_gen: v5e
topology: v5e:2x2
jax: 0.10.0
libtpu: 0.0.40
codegen_flags: <defaults>
</compile_context>

<pallas_src>
import jax
import jax.numpy as jnp
from jax.experimental import pallas as pl
from jax.experimental.pallas import tpu as pltpu


def _transition_kernel(x_ref, w_ref, shift_ref, o_ref):
    # x_ref     : (nb, C_in, TL) uint32 -- lane j packs the bf16 pair (x[2j], x[2j+1])
    # w_ref     : (C_out, C_in)  bf16   -- 1x1-conv weight with BN scale folded in
    # shift_ref : (C_out, 1)     f32    -- folded BN shift (applied after the pool)
    # o_ref     : (nb, C_out, TL)
    w = w_ref[...]              # read once per grid step
    shift = shift_ref[...]      # (C_out, 1); broadcast happens inside the add
    nb = x_ref.shape[0]

    def body(b, carry):
        p = x_ref[b]                                               # (C_in, TL) uint32
        # Unpack the two bf16 halves of every 32-bit lane.  A bf16 is exactly the
        # top 16 bits of the corresponding f32, so shift/mask + same-width bitcast
        # recovers the exact values.  (Which half is "even" vs "odd" is irrelevant:
        # the 2-wide max-pool is symmetric in the pair.)
        half_a = pltpu.bitcast(p << 16, jnp.float32).astype(jnp.bfloat16)
        half_b = pltpu.bitcast(p & jnp.uint32(0xFFFF0000), jnp.float32).astype(jnp.bfloat16)
        # Conv1d(k=1, bias=False) with BN scale folded in == one MXU matmul per
        # half; MaxPool1d(2, 2) == elementwise max of the halves (no lane copy).
        ya = jnp.dot(w, half_a, preferred_element_type=jnp.float32)  # (C_out, TL) f32
        yb = jnp.dot(w, half_b, preferred_element_type=jnp.float32)
        # BN shift after the pool: max(a + s, b + s) == max(a, b) + s.
        y = jnp.maximum(ya, yb) + shift
        # LeakyReLU (default slope 0.01 < 1)  ==  max(y, 0.01 * y).
        y = jnp.maximum(y, jnp.float32(0.01) * y)
        # Dropout(p) is identity in eval mode.
        o_ref[b] = y.astype(o_ref.dtype)
        return carry

    # fori_loop (not a static Python loop) bounds the live vreg set per sample.
    jax.lax.fori_loop(0, nb, body, 0, unroll=nb <= 4)


def _pack_pairs(x):
    """(N, C, L) float -> (N, C, L//2) uint32; lane j packs the bf16 pair (x[2j], x[2j+1]).

    One fused elementwise XLA pass (cast + pair pack).  If the producer of x can
    emit this layout directly, the pre-pass disappears entirely."""
    N, C, L = x.shape
    pairs = x.astype(jnp.bfloat16).reshape(N, C, L // 2, 2)
    return jax.lax.bitcast_convert_type(pairs, jnp.uint32)


def _choose_tiles(N, C_in, C_out, Lh, out_itemsize):
    """Pick (nb, tl) so each grid step moves a few MiB (amortises ~0.35 us/step
    overhead) while double-buffered in+out blocks stay <= ~10 MiB (safe on v7x's
    64 MiB VMEM, generous on v5e/v6e's 128 MiB)."""
    budget = 10 << 20                       # double-buffered in+out block bytes / step
    in_b = C_in * 4                         # packed uint32 bytes per (sample, lane)
    out_b = C_out * out_itemsize            # output bytes per (sample, lane)
    per_lane = 2 * (in_b + out_b)           # x2: input AND output are double-buffered

    # Length tile: lane-dense (multiple of 128) and as large as the budget allows.
    if Lh % 128 != 0 and Lh <= 256:
        tl = Lh                             # tiny ragged case: one full-dim tile
    else:
        cands = [c for c in (2048, 1024, 512, 256, 128)
                 if c <= Lh and c * per_lane <= budget]
        if not cands:
            cands = [128]
        divs = [c for c in cands if Lh % c == 0]
        tl = divs[0] if divs else cands[0]  # ragged last block handled by cdiv grid

    # Batch block: biggest divisor of N that keeps the step under budget.
    cap = max(1, min(N, budget // max(1, tl * per_lane)))
    nb = 1
    for d in range(cap, 0, -1):
        if N % d == 0:
            nb = d
            break

    # v7x has two TensorCores that only get work via >=2 steps on a "parallel"
    # grid axis; make sure the grid is not (1, 1) when the problem can be split.
    if N // nb == 1 and pl.cdiv(Lh, tl) == 1:
        if N >= 2:
            nb = max(d for d in range(1, N // 2 + 1) if N % d == 0)
        elif tl % 256 == 0:
            tl //= 2

    return nb, tl


def transition_block(x, w, gamma, beta, running_mean, running_var, eps=1e-5,
                     out_dtype=None):
    """x: (N, C_in, L) float32.  Returns (N, C_out, L // 2) (eval-mode forward)."""
    N, C_in, L = x.shape
    C_out = w.shape[0]
    # TODO(synk): PyTorch MaxPool1d floors odd lengths; only even L supported here.
    assert L % 2 == 0, "MaxPool1d(k=2, s=2) needs even length"
    Lh = L // 2
    out_dtype = jnp.dtype(x.dtype if out_dtype is None else out_dtype)

    # ---- Fold BatchNorm (eval) into the conv weight + a post-pool shift. ----
    inv_std = jax.lax.rsqrt(running_var.astype(jnp.float32) + eps)
    scale = gamma.astype(jnp.float32) * inv_std                        # (C_out,)
    shift = beta.astype(jnp.float32) - running_mean.astype(jnp.float32) * scale
    w_folded = (w.astype(jnp.float32) * scale[:, None]).astype(jnp.bfloat16)
    shift = shift.reshape(C_out, 1)

    # ---- Single fused prep pass: cast to bf16 and pack each adjacent length pair
    #      into one uint32 lane (keeps the in-kernel even/odd split to cheap VPU
    #      bit ops instead of a lane deinterleave). ----
    x_packed = _pack_pairs(x)                                          # (N, C_in, Lh) u32

    # ---- Tiling (see _choose_tiles). ----
    nb, tl = _choose_tiles(N, C_in, C_out, Lh, out_dtype.itemsize)
    grid = (N // nb, pl.cdiv(Lh, tl))

    block_bytes = 2 * nb * tl * (C_in * 4 + C_out * out_dtype.itemsize)
    w_bytes = C_out * C_in * 2 + C_out * 4
    vmem_limit = int(min(100 << 20, max(32 << 20, block_bytes + 4 * w_bytes + (4 << 20))))

    return pl.pallas_call(
        _transition_kernel,
        out_shape=jax.ShapeDtypeStruct((N, C_out, Lh), out_dtype),
        grid_spec=pltpu.PrefetchScalarGridSpec(
            num_scalar_prefetch=0,
            grid=grid,
            in_specs=[
                pl.BlockSpec((nb, C_in, tl), lambda bi, li: (bi, 0, li)),
                # Weight / shift blocks are grid-invariant (only DMA'd once) and tiny.
                pl.BlockSpec((C_out, C_in), lambda bi, li: (0, 0)),
                pl.BlockSpec((C_out, 1), lambda bi, li: (0, 0)),
            ],
            out_specs=pl.BlockSpec((nb, C_out, tl), lambda bi, li: (bi, 0, li)),
        ),
        compiler_params=pltpu.CompilerParams(
            dimension_semantics=("parallel", "parallel"),
            vmem_limit_bytes=vmem_limit),
    )(x_packed, w_folded, shift)


def reference(x, w, gamma, beta, running_mean, running_var, eps=1e-5):
    """Pure-JAX f32 reference of the (eval-mode) forward pass."""
    y = jnp.einsum("oc,ncl->nol", w, x)                               # Conv1d k=1
    m = running_mean[None, :, None]
    v = running_var[None, :, None]
    y = (y - m) / jnp.sqrt(v + eps) * gamma[None, :, None] + beta[None, :, None]
    N, C, L = y.shape
    y = jnp.max(y.reshape(N, C, L // 2, 2), axis=-1)                  # MaxPool1d(2,2)
    y = jnp.where(y >= 0, y, 0.01 * y)                                # LeakyReLU
    return y                                                          # Dropout = id (eval)


if __name__ == "__main__":
    key = jax.random.PRNGKey(0)
    k_x, k_w, k_g, k_b, k_m, k_v = jax.random.split(key, 6)

    N, C_in, C_out, L = 2, 8, 16, 32   # TransitionBlock(input_size=8, output_size=16, dropout=0.1), eval

    x = jax.random.normal(k_x, (N, C_in, L), dtype=jnp.float32)
    w = 0.1 * jax.random.normal(k_w, (C_out, C_in), dtype=jnp.float32)   # Conv1d weight (C_out, C_in, 1) squeezed
    gamma = jax.random.uniform(k_g, (C_out,), jnp.float32, 0.5, 1.5)     # BN weight
    beta = 0.1 * jax.random.normal(k_b, (C_out,), dtype=jnp.float32)     # BN bias
    running_mean = 0.1 * jax.random.normal(k_m, (C_out,), dtype=jnp.float32)
    running_var = jax.random.uniform(k_v, (C_out,), jnp.float32, 0.5, 1.5)

    out = jax.jit(transition_block)(x, w, gamma, beta, running_mean, running_var)
    out = jax.block_until_ready(out)

    ref = reference(x, w, gamma, beta, running_mean, running_var)
    assert out.shape == (N, C_out, L // 2), out.shape
    # bf16 activations/weights on the MXU (f32 accumulation) vs. the f32 reference.
    assert jnp.allclose(out, ref, atol=2e-2, rtol=2e-2), float(jnp.max(jnp.abs(out - ref)))

    print("KERNEL_OK")
</pallas_src>

<mosaic_0001>
module attributes {stable_mosaic.version = 11 : i64} {
  func.func @_transition_kernel(%arg0: i32, %arg1: i32, %arg2: memref<1x8x16xi32, #tpu.memory_space<vmem>>, %arg3: memref<16x8xbf16, #tpu.memory_space<vmem>>, %arg4: memref<16x1xf32, #tpu.memory_space<vmem>>, %arg5: memref<1x16x16xf32, #tpu.memory_space<vmem>>) attributes {dimension_semantics = [#tpu.dimension_semantics<parallel>, #tpu.dimension_semantics<parallel>], iteration_bounds = array<i64: 2, 1>, scalar_prefetch = 0 : i64, scratch_operands = 0 : i64, tpu.core_type = #tpu.core_type<tc>, window_params = [{transform_indices = @transform_0, window_bounds = array<i64: 1, 8, 16>}, {pipeline_mode = #tpu.pipeline_mode<synchronous>, transform_indices = @transform_1, window_bounds = array<i64: 16, 8>}, {pipeline_mode = #tpu.pipeline_mode<synchronous>, transform_indices = @transform_2, window_bounds = array<i64: 16, 1>}, {transform_indices = @transform_3, window_bounds = array<i64: 1, 16, 16>}]} {
    %c0 = arith.constant 0 : index
    %c0_0 = arith.constant 0 : index
    %0 = vector.load %arg3[%c0, %c0_0] : memref<16x8xbf16, #tpu.memory_space<vmem>>, vector<16x8xbf16>
    %c0_1 = arith.constant 0 : index
    %c0_2 = arith.constant 0 : index
    %1 = vector.load %arg4[%c0_1, %c0_2] : memref<16x1xf32, #tpu.memory_space<vmem>>, vector<16x1xf32>
    %c0_i32 = arith.constant 0 : i32
    %2 = arith.index_cast %c0_i32 : i32 to index
    %c0_3 = arith.constant 0 : index
    %c0_4 = arith.constant 0 : index
    %3 = vector.load %arg2[%2, %c0_3, %c0_4] : memref<1x8x16xi32, #tpu.memory_space<vmem>>, vector<1x8x16xi32>
    %4 = vector.shape_cast %3 : vector<1x8x16xi32> to vector<8x16xi32>
    %c16_i32 = arith.constant 16 : i32
    %5 = vector.broadcast %c16_i32 : i32 to vector<8x16xi32>
    %6 = arith.shli %4, %5 : vector<8x16xi32>
    %7 = tpu.bitcast %6 : vector<8x16xi32> -> vector<8x16xf32>
    %8 = arith.truncf %7 : vector<8x16xf32> to vector<8x16xbf16>
    %c-65536_i32 = arith.constant -65536 : i32
    %9 = vector.broadcast %c-65536_i32 : i32 to vector<8x16xi32>
    %10 = arith.andi %4, %9 : vector<8x16xi32>
    %11 = tpu.bitcast %10 : vector<8x16xi32> -> vector<8x16xf32>
    %12 = arith.truncf %11 : vector<8x16xf32> to vector<8x16xbf16>
    %cst = arith.constant dense<0.000000e+00> : vector<16x16xf32>
    %13 = tpu.matmul %0, %8, %cst {dimension_numbers = #tpu.dot_dimension_numbers<[1], [0], [0], [1], [0, 0, 1, 1], [], []>} : vector<16x8xbf16>, vector<8x16xbf16>, vector<16x16xf32> -> vector<16x16xf32>
    %cst_5 = arith.constant dense<0.000000e+00> : vector<16x16xf32>
    %14 = tpu.matmul %0, %12, %cst_5 {dimension_numbers = #tpu.dot_dimension_numbers<[1], [0], [0], [1], [0, 0, 1, 1], [], []>} : vector<16x8xbf16>, vector<8x16xbf16>, vector<16x16xf32> -> vector<16x16xf32>
    %15 = arith.maximumf %13, %14 : vector<16x16xf32>
    %16 = vector.broadcast %1 : vector<16x1xf32> to vector<16x16xf32>
    %17 = arith.addf %15, %16 : vector<16x16xf32>
    %cst_6 = arith.constant 0.00999999977 : f32
    %18 = vector.broadcast %cst_6 : f32 to vector<16x16xf32>
    %19 = arith.mulf %18, %17 : vector<16x16xf32>
    %20 = arith.maximumf %17, %19 : vector<16x16xf32>
    %21 = arith.index_cast %c0_i32 : i32 to index
    %c0_7 = arith.constant 0 : index
    %c0_8 = arith.constant 0 : index
    %22 = vector.load %arg5[%21, %c0_7, %c0_8] : memref<1x16x16xf32, #tpu.memory_space<vmem>>, vector<1x16x16xf32>
    %23 = vector.shape_cast %22 : vector<1x16x16xf32> to vector<16x16xf32>
    %24 = vector.shape_cast %20 : vector<16x16xf32> to vector<1x16x16xf32>
    tpu.vector_store %arg5[%21, %c0_7, %c0_8], %24 {strides = array<i32>} : memref<1x16x16xf32, #tpu.memory_space<vmem>>, vector<1x16x16xf32>,
    %c1_i32 = arith.constant 1 : i32
    return
  }
  func.func @transform_0(%arg0: i32, %arg1: i32) -> (i32, i32, i32) {
    %c0_i32 = arith.constant 0 : i32
    %c0_i32_0 = arith.constant 0 : i32
    return %arg0, %c0_i32, %arg1 : i32, i32, i32
  }
  func.func @transform_1(%arg0: i32, %arg1: i32) -> (i32, i32) {
    %c0_i32 = arith.constant 0 : i32
    %c0_i32_0 = arith.constant 0 : i32
    %c0_i32_1 = arith.constant 0 : i32
    return %c0_i32, %c0_i32_0 : i32, i32
  }
  func.func @transform_2(%arg0: i32, %arg1: i32) -> (i32, i32) {
    %c0_i32 = arith.constant 0 : i32
    %c0_i32_0 = arith.constant 0 : i32
    %c0_i32_1 = arith.constant 0 : i32
    return %c0_i32, %c0_i32_0 : i32, i32
  }
  func.func @transform_3(%arg0: i32, %arg1: i32) -> (i32, i32, i32) {
    %c0_i32 = arith.constant 0 : i32
    %c0_i32_0 = arith.constant 0 : i32
    return %arg0, %c0_i32, %arg1 : i32, i32, i32
  }
}

</mosaic_0001>

<llo_original>
// kernel: transition_block.1
$region0: #{transition_block.1}
  #allocation0 [shape = 'u32[]', space=smem, size = 0x4, offset = 0x4, fixed_abs, tag = 'smem constant byte address 0x4 - core index']
  #allocation1 [shape = 'u32[72,128]{1,0:T(1,128)}', space=vmem, size = 0x9000, scoped, tag = 'internal scratch']
  %s0 = inlined_call_operand.vmem [shape: u32[2,8,16], index: 0, kind: input, shape index: {}]
  %s1 = inlined_call_operand.vmem [shape: bf16[16,8], index: 1, kind: input, shape index: {}]
  %s2 = inlined_call_operand.vmem [shape: f32[16,1], index: 2, kind: input, shape index: {}]
  %s3 = inlined_call_operand.hbm [shape: f32[2,16,16], index: 3, kind: output, shape index: {}]
  %s4 = sld [smem:[#allocation0]]
  $region45: #{transition_block.1} parent=0
    _
  %s6 = ssub.s32 1, %s4
  %s7 = scalar_select 0, %s6, %s4
  $region1: #{transition_block.1} parent=0
    #allocation2 [shape = 'u8[16384]{0}', space=vmem, size = 0x4000, scoped, tag = 'output window, operand 0']
    #allocation3 [shape = 's32[2]{0}', space=sflag, size = 0x8, scoped, tag = 'scoped memory for transition_block.1']
    %8 = vsyncpa [#allocation3], 0
    %s9 = scalar_lea.sflag [#allocation3], 1
    %10 = vsyncpa %s9, 0
    loop: start=0, step=1, limit=4
    $region2: #{transition_block.1} parent=1 // loop_pre_header
      _
    $region3: #{transition_block.1} parent=1 // loop_header
      %s12 = sphi 0, %s16
      %p13 = scmp.ge.s32.totalorder %s12, 4
      %s19 = sphi 0, %s31
      %s20 = sphi 0, %s27
      %s21 = sphi 0, %s19
      %s22 = sphi 0, %s20
      %s23 = sphi 0, %s21
      %s24 = sphi 0, %s22
      %s36 = sphi 0, %s38
      %s39 = sphi 0, %s36
      %s40 = sphi 0, %s39
      %s56 = sphi 0, %s40
      %s60 = sphi 0, %s60
      %s62 = sphi 0, %s60
      %s63 = sphi 0, %s62
      %s77 = sphi 0, %s63
      %s81 = sphi 0, %s81
      %s83 = sphi 0, %s81
      %s84 = sphi 0, %s83
      %s98 = sphi 0, %s84
      %s106 = sphi 0, %s108
      %s109 = sphi 0, %s106
      %s110 = sphi 0, %s109
      %s126 = sphi 0, %s110
    $region4: #{transition_block.1} parent=1 // loop_header_branch
      %15 = sbr.rel (%p13) target = $region8
    $region5: #{transition_block.1} parent=1 // loop_body
      %s17 = ssub.s32 %s12, 1
      %s18 = ssub.s32 %s12, 2
      %s25 = sadd.s32 1, %s20
      %p26 = scmp.ge.s32.totalorder %s25, 1
      %s27 = scalar_select %p26, 0, %s25
      %s28 = sadd.s32 1, %s19
      %s29 = scalar_select %p26, %s28, %s19
      %p30 = scmp.ge.s32.totalorder %s29, 2
      %s31 = scalar_select %p30, 0, %s29
      %s32 = ssub.s32 %s19, %s31
      %s33 = ssub.s32 %s20, %s27
      %s34 = sor.u32 %s32, %s33
      %p35 = scmp.eq.s32.totalorder %s34, 0
      %s37 = sadd.s32 %s36, 1
      %s38 = scalar_select %p35, %s36, %s37
      %p41 = pneg %p35
      %p42 = scmp.eq.s32.totalorder %s12, 1
      %p43 = por %p41, %p42
      %p44 = scmp.ne.s32.totalorder %s36, %s39
      %p45 = scmp.eq.s32.totalorder %s12, 0
      %p46 = por %p44, %p45
      %p47 = scmp.ne.s32.totalorder %s36, %s39
      %p48 = scmp.eq.s32.totalorder %s17, 1
      %p49 = por %p47, %p48
      %p50 = scmp.ne.s32.totalorder %s39, %s40
      %p51 = scmp.eq.s32.totalorder %s17, 0
      %p52 = por %p50, %p51
      %p53 = scmp.ne.s32.totalorder %s39, %s40
      %p54 = scmp.eq.s32.totalorder %s18, 1
      %p55 = por %p53, %p54
      %p57 = scmp.ne.s32.totalorder %s40, %s56
      %p58 = scmp.eq.s32.totalorder %s18, 0
      %p59 = por %p57, %p58
      %s61 = sadd.s32 %s60, 1
      %p64 = scmp.eq.s32.totalorder %s12, 1
      %p65 = scmp.ne.s32.totalorder %s60, %s62
      %p66 = scmp.eq.s32.totalorder %s12, 0
      %p67 = por %p65, %p66
      %p68 = scmp.ne.s32.totalorder %s60, %s62
      %p69 = scmp.eq.s32.totalorder %s17, 1
      %p70 = por %p68, %p69
      %p71 = scmp.ne.s32.totalorder %s62, %s63
      %p72 = scmp.eq.s32.totalorder %s17, 0
      %p73 = por %p71, %p72
      %p74 = scmp.ne.s32.totalorder %s62, %s63
      %p75 = scmp.eq.s32.totalorder %s18, 1
      %p76 = por %p74, %p75
      %p78 = scmp.ne.s32.totalorder %s63, %s77
      %p79 = scmp.eq.s32.totalorder %s18, 0
      %p80 = por %p78, %p79
      %s82 = sadd.s32 %s81, 1
      %p85 = scmp.eq.s32.totalorder %s12, 1
      %p86 = scmp.ne.s32.totalorder %s81, %s83
      %p87 = scmp.eq.s32.totalorder %s12, 0
      %p88 = por %p86, %p87
      %p89 = scmp.ne.s32.totalorder %s81, %s83
      %p90 = scmp.eq.s32.totalorder %s17, 1
      %p91 = por %p89, %p90
      %p92 = scmp.ne.s32.totalorder %s83, %s84
      %p93 = scmp.eq.s32.totalorder %s17, 0
      %p94 = por %p92, %p93
      %p95 = scmp.ne.s32.totalorder %s83, %s84
      %p96 = scmp.eq.s32.totalorder %s18, 1
      %p97 = por %p95, %p96
      %p99 = scmp.ne.s32.totalorder %s84, %s98
      %p100 = scmp.eq.s32.totalorder %s18, 0
      %p101 = por %p99, %p100
      %s102 = ssub.s32 %s19, %s31
      %s103 = ssub.s32 %s20, %s27
      %s104 = sor.u32 %s102, %s103
      %p105 = scmp.eq.s32.totalorder %s104, 0
      %s107 = sadd.s32 %s106, 1
      %s108 = scalar_select %p105, %s106, %s107
      %p111 = pneg %p105
      %p112 = scmp.eq.s32.totalorder %s12, 1
      %p113 = por %p111, %p112
      %p114 = scmp.ne.s32.totalorder %s106, %s109
      %p115 = scmp.eq.s32.totalorder %s12, 0
      %p116 = por %p114, %p115
      %p117 = scmp.ne.s32.totalorder %s106, %s109
      %p118 = scmp.eq.s32.totalorder %s17, 1
      %p119 = por %p117, %p118
      %p120 = scmp.ne.s32.totalorder %s109, %s110
      %p121 = scmp.eq.s32.totalorder %s17, 0
      %p122 = por %p120, %p121
      %p123 = scmp.ne.s32.totalorder %s109, %s110
      %p124 = scmp.eq.s32.totalorder %s18, 1
      %p125 = por %p123, %p124
      %p127 = scmp.ne.s32.totalorder %s110, %s126
      %p128 = scmp.eq.s32.totalorder %s18, 0
      %p129 = por %p127, %p128
      %p130 = scmp.le.s32.totalorder 1, %s12
      %p131 = scmp.lt.s32.totalorder %s12, 3
      %p132 = pnand %p130, %p131
      %p133 = pneg %p132
      // Predicated region
      $region9: #{transition_block.1} parent=5 // pred_check
        _
      $region10: #{transition_block.1} parent=5 // pred_check_branch
        %135 = sbr.rel (%p132) target = $region12
      $region11: #{transition_block.1} parent=5 // pred_region
        %s136 = ssub.s32 %s12, 1
        // Predicated region
        $region13: #{transition_block.1} parent=11 // pred_check
          %p137 = pneg %p73
        $region14: #{transition_block.1} parent=11 // pred_check_branch
          %139 = sbr.rel (%p137) target = $region16
        $region15: #{transition_block.1} parent=11 // pred_region
          _
        $region16: #{transition_block.1} parent=11 // pred_fallthru
          _
        // Predicated region
        $region17: #{transition_block.1} parent=11 // pred_check
          %p140 = pneg %p94
        $region18: #{transition_block.1} parent=11 // pred_check_branch
          %142 = sbr.rel (%p140) target = $region20
        $region19: #{transition_block.1} parent=11 // pred_region
          _
        $region20: #{transition_block.1} parent=11 // pred_fallthru
          _
      $region12: #{transition_block.1} parent=5 // pred_fallthru
        _
      %p143 = scmp.lt.s32.totalorder %s12, 2
      // Predicated region
      $region21: #{transition_block.1} parent=5 // pred_check
        %p144 = pneg %p143
      $region22: #{transition_block.1} parent=5 // pred_check_branch
        %146 = sbr.rel (%p144) target = $region24
      $region23: #{transition_block.1} parent=5 // pred_region
        // Predicated region
        $region25: #{transition_block.1} parent=23 // pred_check
          %p147 = pneg %p46
        $region26: #{transition_block.1} parent=23 // pred_check_branch
          %149 = sbr.rel (%p147) target = $region28
        $region27: #{transition_block.1} parent=23 // pred_region
          %p150 = scmp.lt.s32.totalorder %s19, 1
          %s151 = scalar_select %p150, %s19, 1
          %p152 = scmp.lt.s32.totalorder %s20, 0
          %s153 = scalar_select %p152, %s20, 0
          %s154 = sadd.s32 %s153, %s151
          %s155 = smul.addr %s154, 8
          %s156 = scalar_lea.vmem %s0, %s155
        $region28: #{transition_block.1} parent=23 // pred_fallthru
          _
      $region24: #{transition_block.1} parent=5 // pred_fallthru
        _
      %p157 = scmp.le.s32.totalorder 1, %s12
      %p158 = scmp.lt.s32.totalorder %s12, 3
      %p159 = pnand %p157, %p158
      %p160 = pneg %p159
      // Predicated region
      $region29: #{transition_block.1} parent=5 // pred_check
        _
      $region30: #{transition_block.1} parent=5 // pred_check_branch
        %162 = sbr.rel (%p159) target = $region32
      $region31: #{transition_block.1} parent=5 // pred_region
        %s163 = ssub.s32 %s12, 1
        %p164 = scmp.lt.s32.totalorder %s21, 1
        %s165 = scalar_select %p164, %s21, 1
        %p166 = scmp.lt.s32.totalorder %s22, 0
        %s167 = scalar_select %p166, %s22, 0
        %s168 = sadd.s32 %s167, %s165
        %s169 = smul.addr %s168, 8
        %s170 = scalar_lea.vmem %s0, %s169
        %p171 = pneg %p52
        %p172 = pneg %p49
        %p173 = pneg %p73
        %p174 = pneg %p70
        %p175 = pneg %p94
        %p176 = pneg %p91
        %p177 = pneg %p122
        %p178 = pneg %p119
        %s179 = sand.u32 %s109, 1
        %s180 = scalar_lea.sflag [#allocation3], %s179
        %s181 = sand.u32 %s109, 1
        %s182 = smul.addr %s181, 16
        %s183 = scalar_lea.vmem [#allocation2], %s182
        %p184 = scmp.lt.s32.totalorder %s21, 1
        %s185 = scalar_select %p184, %s21, 1
        %p186 = scmp.lt.s32.totalorder %s22, 0
        %s187 = scalar_select %p186, %s22, 0
        %s188 = sadd.s32 %s187, %s185
        %s189 = smul.addr %s188, 8
        %s190 = scalar_lea.vmem %s0, %s189
        %v192 = vld [vmem:[%s1] sm:$0xf]
        %v193 = vld [vmem:[%s1 + $0x4] sm:$0xf]
        %v194 = vld [vmem:[%s2] sm:$0xff]
        %v195 = vld [vmem:[%s2 + $0x8] sm:$0xff]
        %v196 = vld [vmem:[%s190] sm:$0xff]
        %v197 = vshll.u32 %v196, 16
        %v199 = vpack.c.bf16 %v197, %v197
        %v200 = vand.u32 %v196, 4294901760
        %v202 = vpack.c.bf16 %v200, %v200
        %v205 = vunpack.c.l.b16 %v192
        %v206 = vunpack.c.l.b16 %v193
        %v207 = vpack.c.b16 %v206, %v205
        %vm208 = vcmask 64512
        %v210 = vsel %vm208, %v207, 0
        %vm212 = vcmask 1043456
        %v214 = vsel %vm212, %v199, 0
        %216 = vmatpush.bf16.msra.mxu0 0
        %217 = vmatpush.bf16.msra.mxu0 0
        %218 = vmatpush.bf16.msra.mxu0 0
        %219 = vmatpush.bf16.msra.mxu0 0
        %220 = vmatpush.bf16.msra.mxu0 0
        %221 = vmatpush.bf16.msra.mxu0 0
        %222 = vmatpush.bf16.msra.mxu0 0
        %223 = vmatpush.bf16.msra.mxu0 %v214
        %224 = vmatmul.bf16.gmra.mxu0 %v210
        %v225 = vpop.f32.mrf.mxu0
        %v226 = vadd.f32 0.0, %v225
        %v227 = vpop.f32.mrf.mxu0
        %v228 = vadd.f32 0.0, %v227
        %229 = vdwg.mxu0
        %v231 = vsel %vm212, %v202, 0
        %233 = vmatpush.bf16.msra.mxu0 0
        %234 = vmatpush.bf16.msra.mxu0 0
        %235 = vmatpush.bf16.msra.mxu0 0
        %236 = vmatpush.bf16.msra.mxu0 0
        %237 = vmatpush.bf16.msra.mxu0 0
        %238 = vmatpush.bf16.msra.mxu0 0
        %239 = vmatpush.bf16.msra.mxu0 0
        %240 = vmatpush.bf16.msra.mxu0 %v231
        %241 = vmatmul.bf16.gmra.mxu0 %v210
        %v242 = vpop.f32.mrf.mxu0
        %v243 = vadd.f32 0.0, %v242
        %v244 = vpop.f32.mrf.mxu0
        %v245 = vadd.f32 0.0, %v244
        %246 = vdwg.mxu0
        %v247 = vmax.f32 %v226, %v243
        %v248 = vmax.f32 %v228, %v245
        %250 = vset.pattern.permute.xlu0 0
        %251 = vperm.xlu0 %250, %v194
        %v252 = vpop.permute.xlu0 %251
        %255 = vset.pattern.permute.xlu0 0
        %256 = vperm.xlu0 %255, %v195
        %v257 = vpop.permute.xlu0 %256
        %v259 = vadd.f32 %v247, %v252
        %v260 = vadd.f32 %v248, %v257
        %v261 = vmul.f32 %v259, 0.01
        %v262 = vmul.f32 %v260, 0.01
        %v263 = vmax.f32 %v259, %v261
        %v264 = vmax.f32 %v260, %v262
        %vm265 = vcmask 130048
        %266 = vst.msk [vmem:[%s183] sm:$0xff] %vm265, %v263
        %267 = vst.msk [vmem:[%s183 + $0x8] sm:$0xff] %vm265, %v264
        %s268 = sand.u32 %s109, 1
        %s269 = scalar_lea.sflag [#allocation3], %s268
        %s270 = sand.u32 %s109, 1
        %s271 = smul.addr %s270, 16
        %s272 = scalar_lea.vmem [#allocation2], %s271
        // Predicated region
        $region33: #{transition_block.1} parent=31 // pred_check
          %p273 = pneg %p119
        $region34: #{transition_block.1} parent=31 // pred_check_branch
          %275 = sbr.rel (%p273) target = $region36
        $region35: #{transition_block.1} parent=31 // pred_region
          %277 = vsyncadd %s269, 0
          %s278 = smul.addr %s21, 2
          %s279 = sadd.s32 %s22, %s278
          %s280 = smul.addr %s279, 8
          %s281 = scalar_lea.hbm %s3, %s280
          %s282 = sshll.u32 %s272, 4
          %s283 = int_to_ptr.vmem [resolvable:$true] %s282
          %s284 = sshll.u32 %s281, 4
          %s285 = int_to_ptr.hbm [resolvable:$true] %s284
          %290 = dma.vmem_to_hbm [thread:$0]  %s283, 256, %s285, %s269, 128, 128, 8
        $region36: #{transition_block.1} parent=31 // pred_fallthru
          _
      $region32: #{transition_block.1} parent=5 // pred_fallthru
        _
      %p291 = scmp.le.s32.totalorder 2, %s12
      // Predicated region
      $region37: #{transition_block.1} parent=5 // pred_check
        %p292 = pneg %p291
      $region38: #{transition_block.1} parent=5 // pred_check_branch
        %294 = sbr.rel (%p292) target = $region40
      $region39: #{transition_block.1} parent=5 // pred_region
        %s295 = ssub.s32 %s12, 2
        // Predicated region
        $region41: #{transition_block.1} parent=39 // pred_check
          %p296 = pneg %p125
        $region42: #{transition_block.1} parent=39 // pred_check_branch
          %298 = sbr.rel (%p296) target = $region44
        $region43: #{transition_block.1} parent=39 // pred_region
          %s299 = sand.u32 %s110, 1
          %s300 = scalar_lea.sflag [#allocation3], %s299
          %s301 = sand.u32 %s110, 1
          %s302 = smul.addr %s301, 16
          %s303 = scalar_lea.vmem [#allocation2], %s302
          %305 = dma.done %s300, 256
        $region44: #{transition_block.1} parent=39 // pred_fallthru
          _
      $region40: #{transition_block.1} parent=5 // pred_fallthru
        _
    $region6: #{transition_block.1} parent=1 // loop_footer
      %s16 = sadd.s32 1, %s12
    $region7: #{transition_block.1} parent=1 // loop_footer_branch
      %11 = sbr.rel target = $region3
    $region8: #{transition_block.1} parent=1 // loop_exit
      _
    %306 = vsyncpa [#allocation3], 1
    %s307 = scalar_lea.sflag [#allocation3], 1
    %308 = vsyncpa %s307, 1

</llo_original>
